<compile_context>
chip_gen: v5e
topology: v5e:2x2
jax: 0.10.0
libtpu: 0.0.40
codegen_flags: <defaults>
</compile_context>

<pallas_src>
import math
from collections import defaultdict

import jax
import jax.numpy as jnp
from jax.experimental import pallas as pl
from jax.experimental.pallas import tpu as pltpu

_EPS = 1e-6
_ROW_TILE_CAP = 1024                 # empirical sweet spot (256-1024)
_TILE_VMEM_BUDGET = 20 << 20         # bytes of double-buffered tile traffic
_VMEM_LIMIT_BYTES = 32 << 20         # safe on v5e(128M)/v6e(128M)/v7x(64M)


def _sharpness_kernel(f_ref, d_ref, o_ref):
    """f_ref: (T, 1) raw sharpening logits; d_ref/o_ref: (T, N)."""
    x = f_ref[...]
    # oneplus(x) = 1 + softplus(x), numerically-stable softplus.
    f = 1.0 + jnp.maximum(x, 0.0) + jnp.log1p(jnp.exp(-jnp.abs(x)))

    # Fold the max-normalization into the exponent:
    #   (d/m)^f = exp(f * (log d - log m)),  log is monotone so
    #   log(max d) == max(log d).
    logd = jnp.log(d_ref[...] + _EPS)
    m = jnp.max(logd, axis=-1, keepdims=True)
    e = jnp.exp(f * (logd - m))
    s = jnp.sum(e, axis=-1, keepdims=True)
    # Exact divide for the sum-normalize (approx recip ~2^-12 would exceed
    # the 1e-5 tolerance vs the reference).
    o_ref[...] = (e / s).astype(o_ref.dtype)


def _choose_tile_rows(R, N):
    """Largest row tile (multiple of 8, <= cap) fitting the VMEM budget."""
    rp8 = -(-R // 8) * 8
    # double-buffered: input tile + output tile + factor column, all f32
    bytes_per_row = 2 * (2 * N + 1) * 4
    cap = max(8, (_TILE_VMEM_BUDGET // bytes_per_row) // 8 * 8)
    return int(min(rp8, _ROW_TILE_CAP, cap))


def _sharpen_rows(dist, factor):
    """dist: [R, N] f32, factor: [R] f32 -> [R, N] f32 (sharpened rows)."""
    R, N = dist.shape
    tile = _choose_tile_rows(R, N)
    Rp = -(-R // tile) * tile
    if Rp != R:
        # Pad with harmless rows (dist=1, factor=0) so every block is valid.
        dist = jnp.concatenate(
            [dist, jnp.ones((Rp - R, N), jnp.float32)], axis=0)
        factor = jnp.concatenate(
            [factor, jnp.zeros((Rp - R,), jnp.float32)], axis=0)
    f2 = factor.reshape(Rp, 1)

    out = pl.pallas_call(
        _sharpness_kernel,
        out_shape=jax.ShapeDtypeStruct((Rp, N), jnp.float32),
        grid=(Rp // tile,),
        in_specs=[
            pl.BlockSpec((tile, 1), lambda r: (r, 0)),
            pl.BlockSpec((tile, N), lambda r: (r, 0)),
        ],
        out_specs=pl.BlockSpec((tile, N), lambda r: (r, 0)),
        compiler_params=pltpu.CompilerParams(
            dimension_semantics=("parallel",),
            vmem_limit_bytes=_VMEM_LIMIT_BYTES),
    )(f2, dist)
    return out[:R] if Rp != R else out


class DistSharpnessEnhancer:
    """JAX/Pallas port of the PyTorch DistSharpnessEnhancer."""

    def __init__(self, n_heads):
        self.n_heads = n_heads if isinstance(n_heads, list) else [n_heads]
        self.n_data = sum(self.n_heads)

    def __call__(self, nn_input, *dists):
        assert len(dists) == len(self.n_heads)
        x = nn_input[..., :self.n_data]

        flat_d, flat_f, meta = [], [], []
        off = 0
        for i, d in enumerate(dists):
            n = self.n_heads[i]
            f = x[..., off:off + n]          # raw factor; oneplus done in kernel
            off += n
            if d.ndim == 2:
                assert n == 1
                B, N = d.shape
                fd = d.astype(jnp.float32)
                ff = f.reshape(B).astype(jnp.float32)
                meta.append((d.shape, B, N))
            elif d.ndim == 3:
                B, H, N = d.shape
                assert n == H
                fd = d.reshape(B * H, N).astype(jnp.float32)
                ff = f.reshape(B * H).astype(jnp.float32)
                meta.append((d.shape, B * H, N))
            else:
                raise AssertionError("dist must be 2-D or 3-D")
            flat_d.append(fd)
            flat_f.append(ff)

        # Fuse all dists sharing the same N into a single pallas_call.
        groups = defaultdict(list)
        for i, (_, _, N) in enumerate(meta):
            groups[N].append(i)

        results = [None] * len(dists)
        for N, idxs in groups.items():
            if len(idxs) > 1:
                d_cat = jnp.concatenate([flat_d[i] for i in idxs], axis=0)
                f_cat = jnp.concatenate([flat_f[i] for i in idxs], axis=0)
            else:
                d_cat, f_cat = flat_d[idxs[0]], flat_f[idxs[0]]
            out = _sharpen_rows(d_cat, f_cat)
            r0 = 0
            for i in idxs:
                shape, R, _ = meta[i]
                results[i] = out[r0:r0 + R].reshape(shape)
                r0 += R
        return results

    def get_neural_input_size(self):
        return self.n_data


def _reference(nn_input, dists, n_heads):
    """Pure-JAX reference, mirrors the PyTorch forward exactly."""
    n_data = sum(n_heads)
    x = nn_input[..., :n_data]
    x = 1.0 + jax.nn.softplus(x)
    res, off = [], 0
    for i, d in enumerate(dists):
        n = n_heads[i]
        f = x[..., off:off + n]
        off += n
        if d.ndim == 3:
            f = f[..., None]
        d = d + _EPS
        d = d / jnp.max(d, axis=-1, keepdims=True)
        d = d ** f
        d = d / jnp.sum(d, axis=-1, keepdims=True)
        res.append(d)
    return res


if __name__ == "__main__":
    key = jax.random.PRNGKey(0)
    k1, k2, k3 = jax.random.split(key, 3)

    B = 2
    n_heads = [4, 1]          # one 3-D dist with 4 heads, one 2-D dist
    N1, N2 = 16, 16

    enhancer = DistSharpnessEnhancer(n_heads)

    # nn_input has a few extra trailing columns (module only uses first n_data)
    nn_input = jax.random.normal(k1, (B, enhancer.n_data + 3), dtype=jnp.float32)
    dist_a = jax.nn.softmax(
        jax.random.normal(k2, (B, n_heads[0], N1), dtype=jnp.float32), axis=-1)
    dist_b = jax.nn.softmax(
        jax.random.normal(k3, (B, N2), dtype=jnp.float32), axis=-1)

    outs = enhancer(nn_input, dist_a, dist_b)
    outs = [jax.block_until_ready(o) for o in outs]

    refs = _reference(nn_input, (dist_a, dist_b), n_heads)
    for o, r in zip(outs, refs):
        assert o.shape == r.shape and o.dtype == r.dtype
        assert jnp.allclose(o, r, atol=1e-5, rtol=1e-5), "mismatch vs reference"

    print("KERNEL_OK")
</pallas_src>

<mosaic_0001>
module attributes {stable_mosaic.version = 11 : i64} {
  func.func @_sharpness_kernel(%arg0: i32, %arg1: memref<16x1xf32, #tpu.memory_space<vmem>>, %arg2: memref<16x16xf32, #tpu.memory_space<vmem>>, %arg3: memref<16x16xf32, #tpu.memory_space<vmem>>) attributes {dimension_semantics = [#tpu.dimension_semantics<parallel>], iteration_bounds = array<i64: 1>, scalar_prefetch = 0 : i64, scratch_operands = 0 : i64, tpu.core_type = #tpu.core_type<tc>, window_params = [{transform_indices = @transform_0, window_bounds = array<i64: 16, 1>}, {transform_indices = @transform_1, window_bounds = array<i64: 16, 16>}, {transform_indices = @transform_2, window_bounds = array<i64: 16, 16>}]} {
    %c0 = arith.constant 0 : index
    %c0_0 = arith.constant 0 : index
    %0 = vector.load %arg1[%c0, %c0_0] : memref<16x1xf32, #tpu.memory_space<vmem>>, vector<16x1xf32>
    %cst = arith.constant 0.000000e+00 : f32
    %1 = vector.broadcast %cst : f32 to vector<16x1xf32>
    %2 = arith.maximumf %0, %1 : vector<16x1xf32>
    %cst_1 = arith.constant 1.000000e+00 : f32
    %3 = vector.broadcast %cst_1 : f32 to vector<16x1xf32>
    %4 = arith.addf %3, %2 : vector<16x1xf32>
    %5 = math.absf %0 : vector<16x1xf32>
    %cst_2 = arith.constant 0.000000e+00 : f32
    %6 = vector.broadcast %cst_2 : f32 to vector<16x1xf32>
    %7 = arith.subf %6, %5 : vector<16x1xf32>
    %8 = math.exp %7 : vector<16x1xf32>
    %9 = math.log1p %8 : vector<16x1xf32>
    %10 = arith.addf %4, %9 : vector<16x1xf32>
    %c0_3 = arith.constant 0 : index
    %c0_4 = arith.constant 0 : index
    %11 = vector.load %arg2[%c0_3, %c0_4] : memref<16x16xf32, #tpu.memory_space<vmem>>, vector<16x16xf32>
    %cst_5 = arith.constant 9.99999997E-7 : f32
    %12 = vector.broadcast %cst_5 : f32 to vector<16x16xf32>
    %13 = arith.addf %11, %12 : vector<16x16xf32>
    %14 = math.log %13 : vector<16x16xf32>
    %cst_6 = arith.constant dense<0xFF800000> : vector<16xf32>
    %15 = vector.multi_reduction <maximumf>, %14, %cst_6 [1] : vector<16x16xf32> to vector<16xf32>
    %16 = vector.shape_cast %15 : vector<16xf32> to vector<16x1xf32>
    %17 = vector.broadcast %16 : vector<16x1xf32> to vector<16x16xf32>
    %18 = arith.subf %14, %17 : vector<16x16xf32>
    %19 = vector.broadcast %10 : vector<16x1xf32> to vector<16x16xf32>
    %20 = arith.mulf %19, %18 : vector<16x16xf32>
    %21 = math.exp %20 : vector<16x16xf32>
    %cst_7 = arith.constant dense<0.000000e+00> : vector<16xf32>
    %22 = vector.multi_reduction <add>, %21, %cst_7 [1] : vector<16x16xf32> to vector<16xf32>
    %23 = vector.shape_cast %22 : vector<16xf32> to vector<16x1xf32>
    %24 = vector.broadcast %23 : vector<16x1xf32> to vector<16x16xf32>
    %25 = arith.divf %21, %24 : vector<16x16xf32>
    %c0_8 = arith.constant 0 : index
    %c0_9 = arith.constant 0 : index
    %26 = vector.load %arg3[%c0_8, %c0_9] : memref<16x16xf32, #tpu.memory_space<vmem>>, vector<16x16xf32>
    tpu.vector_store %arg3[%c0_8, %c0_9], %25 {strides = array<i32>} : memref<16x16xf32, #tpu.memory_space<vmem>>, vector<16x16xf32>,
    return
  }
  func.func @transform_0(%arg0: i32) -> (i32, i32) {
    %c0_i32 = arith.constant 0 : i32
    %c0_i32_0 = arith.constant 0 : i32
    return %arg0, %c0_i32 : i32, i32
  }
  func.func @transform_1(%arg0: i32) -> (i32, i32) {
    %c0_i32 = arith.constant 0 : i32
    %c0_i32_0 = arith.constant 0 : i32
    return %arg0, %c0_i32 : i32, i32
  }
  func.func @transform_2(%arg0: i32) -> (i32, i32) {
    %c0_i32 = arith.constant 0 : i32
    %c0_i32_0 = arith.constant 0 : i32
    return %arg0, %c0_i32 : i32, i32
  }
}

</mosaic_0001>

<llo_original>
// kernel: tpu_custom_call.1
$region0: #{tpu_custom_call.1}
  #allocation0 [shape = 'u32[]', space=smem, size = 0x4, offset = 0x4, fixed_abs, tag = 'smem constant byte address 0x4 - core index']
  #allocation1 [shape = 'u32[72,128]{1,0:T(1,128)}', space=vmem, size = 0x9000, scoped, tag = 'internal scratch']
  %s0 = inlined_call_operand.vmem [shape: f32[16,1], index: 0, kind: input, shape index: {}]
  %s1 = inlined_call_operand.vmem [shape: f32[16,16], index: 1, kind: input, shape index: {}]
  %s2 = inlined_call_operand.hbm [shape: f32[16,16], index: 2, kind: output, shape index: {}]
  %s3 = sld [smem:[#allocation0]]
  $region18: #{tpu_custom_call.1} parent=0
    _
  %s5 = ssub.s32 1, %s3
  %s6 = scalar_select 0, %s5, %s3
  $region1: #{tpu_custom_call.1} parent=0
    #allocation2 [shape = 'u8[8192]{0}', space=vmem, size = 0x2000, scoped, tag = 'output window, operand 0, single buffered']
    #allocation3 [shape = 's32[1]{0}', space=sflag, size = 0x4, scoped, tag = 'scoped memory for tpu_custom_call.1']
    %7 = vsyncpa [#allocation3], 0
    // Predicated region
    $region2: #{tpu_custom_call.1} parent=1 // pred_check
      _
    $region3: #{tpu_custom_call.1} parent=1 // pred_check_branch
      %9 = sbr.rel (0) target = $region5
    $region4: #{tpu_custom_call.1} parent=1 // pred_region
      _
    $region5: #{tpu_custom_call.1} parent=1 // pred_fallthru
      _
    // Predicated region
    $region6: #{tpu_custom_call.1} parent=1 // pred_check
      _
    $region7: #{tpu_custom_call.1} parent=1 // pred_check_branch
      %11 = sbr.rel (0) target = $region9
    $region8: #{tpu_custom_call.1} parent=1 // pred_region
      _
    $region9: #{tpu_custom_call.1} parent=1 // pred_fallthru
      _
    %v12 = vld [vmem:[%s0] sm:$0xff]
    %v13 = vld [vmem:[%s0 + $0x8] sm:$0xff]
    %v14 = vmax.f32 %v12, 0.0
    %v15 = vmax.f32 %v13, 0.0
    %v16 = vadd.f32 %v14, 1.0
    %v17 = vadd.f32 %v15, 1.0
    %v18 = vand.u32 2147483647, %v12
    %v19 = vand.u32 2147483647, %v13
    %v20 = vsub.f32 0.0, %v18
    %v21 = vsub.f32 0.0, %v19
    %v22 = vmul.f32 %v20, 1.442695
    %v23 = vpow.pop %v22
    %v24 = vmul.f32 %v21, 1.442695
    %v25 = vpow.pop %v24
    %v26 = vadd.f32 %v23, 1.0
    %v27 = vlog2.pop %v26
    %v28 = vmul.f32 %v27, 0.6931472
    %v29 = vmul.f32 -0.5, %v23
    %v30 = vadd.f32 %v29, 1.0
    %v31 = vmul.f32 %v30, %v23
    %v32 = vand.u32 2147483647, %v23
    %vm33 = vcmp.lt.f32.partialorder %v32, 0.0004427343
    %v34 = vsel %vm33, %v31, %v28
    %v35 = vadd.f32 %v25, 1.0
    %v36 = vlog2.pop %v35
    %v37 = vmul.f32 %v36, 0.6931472
    %v38 = vmul.f32 -0.5, %v25
    %v39 = vadd.f32 %v38, 1.0
    %v40 = vmul.f32 %v39, %v25
    %v41 = vand.u32 2147483647, %v25
    %vm42 = vcmp.lt.f32.partialorder %v41, 0.0004427343
    %v43 = vsel %vm42, %v40, %v37
    %v44 = vadd.f32 %v16, %v34
    %v45 = vadd.f32 %v17, %v43
    %v46 = vld [vmem:[%s1] sm:$0xff]
    %v47 = vld [vmem:[%s1 + $0x8] sm:$0xff]
    %v48 = vadd.f32 %v46, 1e-06
    %v49 = vadd.f32 %v47, 1e-06
    %v50 = vlog2.pop %v48
    %v51 = vmul.f32 %v50, 0.6931472
    %v52 = vlog2.pop %v49
    %v53 = vmul.f32 %v52, 0.6931472
    %vm54 = vcmask 130048
    %v55 = vsel %vm54, %v51, -inf
    %56 = vmax.xlane.f32.xlu0 %v55
    %v57 = vpop.xlane.xlu0 %56
    %v58 = vsel %vm54, %v53, -inf
    %59 = vmax.xlane.f32.xlu0 %v58
    %v60 = vpop.xlane.xlu0 %59
    %v61 = vsub.f32 %v51, %v57
    %v62 = vsub.f32 %v53, %v60
    %64 = vset.pattern.permute.xlu0 0
    %65 = vperm.xlu0 %64, %v44
    %v66 = vpop.permute.xlu0 %65
    %69 = vset.pattern.permute.xlu0 0
    %70 = vperm.xlu0 %69, %v45
    %v71 = vpop.permute.xlu0 %70
    %v73 = vmul.f32 %v66, %v61
    %v74 = vmul.f32 %v71, %v62
    %v75 = vmul.f32 %v73, 1.442695
    %v76 = vpow.pop %v75
    %v77 = vmul.f32 %v74, 1.442695
    %v78 = vpow.pop %v77
    %v79 = vsel %vm54, %v76, 0.0
    %80 = vadd.xlane.f32.xlu0 %v79
    %v81 = vpop.xlane.xlu0 %80
    %v82 = vsel %vm54, %v78, 0.0
    %83 = vadd.xlane.f32.xlu0 %v82
    %v84 = vpop.xlane.xlu0 %83
    %v85 = vrcp.pop %v81
    %v86 = vmul.f32 %v81, %v85
    %v87 = vsub.f32 1.0, %v86
    %v88 = vmul.f32 %v85, %v87
    %v89 = vadd.f32 %v85, %v88
    %vm90 = vweird.f32 %v81
    %vm91 = vweird.f32 %v85
    %vm92 = vmor %vm90, %vm91
    %v93 = vsel %vm92, %v85, %v89
    %v94 = vand.u32 2147483647, %v81
    %vm95 = vcmp.eq.f32.partialorder %v94, 8.507059e+37
    %v96 = vand.u32 %v81, 2147483648
    %v97 = vor.u32 1.1754944e-38, %v96
    %v98 = vsel %vm95, %v97, %v93
    %v99 = vmul.f32 %v76, %v98
    %v100 = vrcp.pop %v84
    %v101 = vmul.f32 %v84, %v100
    %v102 = vsub.f32 1.0, %v101
    %v103 = vmul.f32 %v100, %v102
    %v104 = vadd.f32 %v100, %v103
    %vm105 = vweird.f32 %v84
    %vm106 = vweird.f32 %v100
    %vm107 = vmor %vm105, %vm106
    %v108 = vsel %vm107, %v100, %v104
    %v109 = vand.u32 2147483647, %v84
    %vm110 = vcmp.eq.f32.partialorder %v109, 8.507059e+37
    %v111 = vand.u32 %v84, 2147483648
    %v112 = vor.u32 1.1754944e-38, %v111
    %v113 = vsel %vm110, %v112, %v108
    %v114 = vmul.f32 %v78, %v113
    %115 = vst.msk [vmem:[#allocation2] sm:$0xff] %vm54, %v99
    %116 = vst.msk [vmem:[#allocation2 + $0x8] sm:$0xff] %vm54, %v114
    // Predicated region
    $region10: #{tpu_custom_call.1} parent=1 // pred_check
      _
    $region11: #{tpu_custom_call.1} parent=1 // pred_check_branch
      %118 = sbr.rel (0) target = $region13
    $region12: #{tpu_custom_call.1} parent=1 // pred_region
      %120 = vsyncadd [#allocation3], 0
      %s121 = sshll.u32 [#allocation2], 4
      %s122 = int_to_ptr.vmem [resolvable:$true] %s121
      %s123 = sshll.u32 %s2, 4
      %s124 = int_to_ptr.hbm [resolvable:$true] %s123
      %129 = dma.vmem_to_hbm [thread:$0]  %s122, 256, %s124, [#allocation3], 128, 128, 8
    $region13: #{tpu_custom_call.1} parent=1 // pred_fallthru
      _
    // Predicated region
    $region14: #{tpu_custom_call.1} parent=1 // pred_check
      _
    $region15: #{tpu_custom_call.1} parent=1 // pred_check_branch
      %131 = sbr.rel (0) target = $region17
    $region16: #{tpu_custom_call.1} parent=1 // pred_region
      %133 = dma.done [#allocation3], 256
    $region17: #{tpu_custom_call.1} parent=1 // pred_fallthru
      _
    %134 = vsyncpa [#allocation3], 1

</llo_original>
